<compile_context>
chip_gen: v7x
topology: tpu7x:2x2x1
jax: 0.10.0
libtpu: 0.0.40
codegen_flags: <defaults>
</compile_context>

<pallas_src>
import jax
import jax.numpy as jnp
from jax import lax
from jax.experimental import pallas as pl
from jax.experimental.pallas import tpu as pltpu

# ---------------- config (small but TPU-layout friendly) ----------------
BATCH = 2
SEQ = 8
HIDDEN = 128
VOCAB = 512
VOCAB_TILE = 256
RMS_EPS = 1e-6


# ---------------- fused RMSNorm + lm_head kernel ----------------
def lm_head_kernel(x_ref, g_ref, w_ref, o_ref):
    # x_ref: (M, H) f32 activations (M = B*S), resident across all vocab tiles
    # g_ref: (1, H) f32 RMSNorm weight
    # w_ref: (H, TV) bf16 lm_head weight tile (already transposed: in x out)
    # o_ref: (M, TV) f32 logits tile
    x = x_ref[...]                                            # (M, H) f32

    # ---- RMSNorm (f32 math, matches PyTorch reference) ----
    var = jnp.mean(x * x, axis=-1, keepdims=True)             # (M, 1)
    xn = x * lax.rsqrt(var + RMS_EPS) * g_ref[...]            # (M, H) f32

    # ---- lm_head projection: bf16 operands, f32 accumulation on the MXU ----
    logits = jnp.dot(xn.astype(jnp.bfloat16), w_ref[...],
                     preferred_element_type=jnp.float32)      # (M, TV) f32
    o_ref[...] = logits.astype(o_ref.dtype)


def gpt_lm_head(hidden_states, norm_weight, lm_head_weight, *, tv=VOCAB_TILE):
    """hidden_states: (B, S, H) f32
       norm_weight:   (H,)      f32  (RMSNorm gamma)
       lm_head_weight:(V, H)    f32  (PyTorch nn.Linear weight layout)
    """
    B, S, H = hidden_states.shape
    V = lm_head_weight.shape[0]
    assert V % tv == 0

    M = B * S
    x2 = hidden_states.reshape(M, H).astype(jnp.float32)       # fold batch into rows
    g = norm_weight.reshape(1, H).astype(jnp.float32)
    w = lm_head_weight.T.astype(jnp.bfloat16)                  # (H, V), bf16 MXU operand

    logits = pl.pallas_call(
        lm_head_kernel,
        out_shape=jax.ShapeDtypeStruct((M, V), jnp.float32),
        grid_spec=pltpu.PrefetchScalarGridSpec(
            num_scalar_prefetch=0,
            grid=(V // tv,),
            in_specs=[
                pl.BlockSpec((M, H), lambda j: (0, 0)),        # activations (resident)
                pl.BlockSpec((1, H), lambda j: (0, 0)),        # norm weight (resident)
                pl.BlockSpec((H, tv), lambda j: (0, j)),       # weight vocab tile
            ],
            out_specs=pl.BlockSpec((M, tv), lambda j: (0, j)), # logits vocab tile
        ),
        compiler_params=pltpu.CompilerParams(
            dimension_semantics=("parallel",)),                # vocab tiles independent
    )(x2, g, w)

    return logits.reshape(B, S, V)


# ---------------- plain-JAX reference (for verification) ----------------
def reference(hidden_states, norm_weight, lm_head_weight):
    x = hidden_states.astype(jnp.float32)
    var = jnp.mean(x * x, axis=-1, keepdims=True)
    xn = x * lax.rsqrt(var + RMS_EPS) * norm_weight
    return xn @ lm_head_weight.T.astype(jnp.float32)


# ---------------- deterministic parameter init ----------------
def init_params(key):
    k_w, = jax.random.split(key, 1)
    return {
        'norm_weight': jnp.ones((HIDDEN,), jnp.float32),
        'lm_head_weight': jax.random.normal(
            k_w, (VOCAB, HIDDEN), jnp.float32) * 0.02,
    }


if __name__ == "__main__":
    key = jax.random.PRNGKey(0)
    kx, kp = jax.random.split(key)
    x = jax.random.normal(kx, (BATCH, SEQ, HIDDEN), jnp.float32)
    params = init_params(kp)

    out = gpt_lm_head(x, params['norm_weight'], params['lm_head_weight'])
    out = jax.block_until_ready(out)

    ref = reference(x, params['norm_weight'], params['lm_head_weight'])
    assert out.shape == (BATCH, SEQ, VOCAB), out.shape
    # bf16 MXU operands vs. f32 reference -> loose-but-safe tolerance
    assert jnp.allclose(out, ref, rtol=2e-2, atol=2e-2), \
        f"max abs diff {jnp.max(jnp.abs(out - ref))}"
    print("KERNEL_OK")
</pallas_src>

<mosaic_0001>
module attributes {stable_mosaic.version = 11 : i64} {
  func.func @lm_head_kernel(%arg0: i32, %arg1: memref<16x128xf32, #tpu.memory_space<vmem>>, %arg2: memref<1x128xf32, #tpu.memory_space<vmem>>, %arg3: memref<128x256xbf16, #tpu.memory_space<vmem>>, %arg4: memref<16x256xf32, #tpu.memory_space<vmem>>) attributes {dimension_semantics = [#tpu.dimension_semantics<parallel>], iteration_bounds = array<i64: 2>, scalar_prefetch = 0 : i64, scratch_operands = 0 : i64, tpu.core_type = #tpu.core_type<tc>, window_params = [{pipeline_mode = #tpu.pipeline_mode<synchronous>, transform_indices = @transform_0, window_bounds = array<i64: 16, 128>}, {pipeline_mode = #tpu.pipeline_mode<synchronous>, transform_indices = @transform_1, window_bounds = array<i64: 1, 128>}, {transform_indices = @transform_2, window_bounds = array<i64: 128, 256>}, {transform_indices = @transform_3, window_bounds = array<i64: 16, 256>}]} {
    %c0 = arith.constant 0 : index
    %c0_0 = arith.constant 0 : index
    %0 = vector.load %arg1[%c0, %c0_0] : memref<16x128xf32, #tpu.memory_space<vmem>>, vector<16x128xf32>
    %1 = arith.mulf %0, %0 : vector<16x128xf32>
    %cst = arith.constant dense<0.000000e+00> : vector<16xf32>
    %2 = vector.multi_reduction <add>, %1, %cst [1] : vector<16x128xf32> to vector<16xf32>
    %3 = vector.shape_cast %2 : vector<16xf32> to vector<16x1xf32>
    %cst_1 = arith.constant 1.280000e+02 : f32
    %4 = vector.broadcast %cst_1 : f32 to vector<16x1xf32>
    %5 = arith.divf %3, %4 : vector<16x1xf32>
    %cst_2 = arith.constant 9.99999997E-7 : f32
    %6 = vector.broadcast %cst_2 : f32 to vector<16x1xf32>
    %7 = arith.addf %5, %6 : vector<16x1xf32>
    %8 = math.rsqrt %7 : vector<16x1xf32>
    %9 = vector.broadcast %8 : vector<16x1xf32> to vector<16x128xf32>
    %10 = arith.mulf %0, %9 : vector<16x128xf32>
    %c0_3 = arith.constant 0 : index
    %c0_4 = arith.constant 0 : index
    %11 = vector.load %arg2[%c0_3, %c0_4] : memref<1x128xf32, #tpu.memory_space<vmem>>, vector<1x128xf32>
    %12 = vector.broadcast %11 : vector<1x128xf32> to vector<16x128xf32>
    %13 = arith.mulf %10, %12 : vector<16x128xf32>
    %14 = arith.truncf %13 : vector<16x128xf32> to vector<16x128xbf16>
    %c0_5 = arith.constant 0 : index
    %c0_6 = arith.constant 0 : index
    %15 = vector.load %arg3[%c0_5, %c0_6] : memref<128x256xbf16, #tpu.memory_space<vmem>>, vector<128x256xbf16>
    %cst_7 = arith.constant dense<0.000000e+00> : vector<16x256xf32>
    %16 = tpu.matmul %14, %15, %cst_7 {dimension_numbers = #tpu.dot_dimension_numbers<[1], [0], [0], [1], [0, 0, 1, 1], [], []>} : vector<16x128xbf16>, vector<128x256xbf16>, vector<16x256xf32> -> vector<16x256xf32>
    %c0_8 = arith.constant 0 : index
    %c0_9 = arith.constant 0 : index
    %17 = vector.load %arg4[%c0_8, %c0_9] : memref<16x256xf32, #tpu.memory_space<vmem>>, vector<16x256xf32>
    tpu.vector_store %arg4[%c0_8, %c0_9], %16 {strides = array<i32>} : memref<16x256xf32, #tpu.memory_space<vmem>>, vector<16x256xf32>,
    return
  }
  func.func @transform_0(%arg0: i32) -> (i32, i32) {
    %c0_i32 = arith.constant 0 : i32
    %c0_i32_0 = arith.constant 0 : i32
    %c0_i32_1 = arith.constant 0 : i32
    return %c0_i32, %c0_i32_0 : i32, i32
  }
  func.func @transform_1(%arg0: i32) -> (i32, i32) {
    %c0_i32 = arith.constant 0 : i32
    %c0_i32_0 = arith.constant 0 : i32
    %c0_i32_1 = arith.constant 0 : i32
    return %c0_i32, %c0_i32_0 : i32, i32
  }
  func.func @transform_2(%arg0: i32) -> (i32, i32) {
    %c0_i32 = arith.constant 0 : i32
    %c0_i32_0 = arith.constant 0 : i32
    return %c0_i32, %arg0 : i32, i32
  }
  func.func @transform_3(%arg0: i32) -> (i32, i32) {
    %c0_i32 = arith.constant 0 : i32
    %c0_i32_0 = arith.constant 0 : i32
    return %c0_i32, %arg0 : i32, i32
  }
}

</mosaic_0001>

<llo_original>
// kernel: tpu_custom_call.1
$region0: #{tpu_custom_call.1}
  #allocation0 [shape = 'u32[]', space=smem, size = 0x4, offset = 0x4, fixed_abs, tag = 'smem constant byte address 0x4 - core index']
  #allocation1 [shape = 'u32[144,128]{1,0:T(1,128)}', space=vmem, size = 0x12000, scoped, tag = 'internal scratch']
  %s0 = inlined_call_operand.hbm [shape: f32[16,128], index: 0, kind: input, shape index: {}]
  %s1 = inlined_call_operand.vmem [shape: f32[1,128], index: 1, kind: input, shape index: {}]
  %s2 = inlined_call_operand.hbm [shape: bf16[128,512], index: 2, kind: input, shape index: {}]
  %s3 = inlined_call_operand.hbm [shape: f32[16,512], index: 3, kind: output, shape index: {}]
  %s4 = sld [smem:[#allocation0]]
  $region53: #{tpu_custom_call.1} parent=0
    _
  %s6 = ssub.s32 1, %s4
  %s7 = scalar_select 0, %s6, %s4
  $region1: #{tpu_custom_call.1} parent=0
    #allocation2 [shape = 'u8[8192]{0}', space=vmem, size = 0x2000, scoped, tag = 'input window, operand 0, single buffered']
    #allocation3 [shape = 's32[2]{0}', space=sflag, size = 0x8, scoped, tag = 'scoped memory for tpu_custom_call.1']
    #allocation4 [shape = 's32[2]{0}', space=sflag, size = 0x8, scoped, tag = 'scoped memory for tpu_custom_call.1']
    #allocation5 [shape = 'u8[131072]{0}', space=vmem, size = 0x20000, scoped, tag = 'input window, operand 2']
    #allocation6 [shape = 's32[2]{0}', space=sflag, size = 0x8, scoped, tag = 'scoped memory for tpu_custom_call.1']
    #allocation7 [shape = 'u8[32768]{0}', space=vmem, size = 0x8000, scoped, tag = 'output window, operand 0']
    %8 = vsyncpa [#allocation3], 0
    %9 = vsyncpa [#allocation6], 0
    %s10 = scalar_lea.sflag [#allocation6], 1
    %11 = vsyncpa %s10, 0
    %12 = vsyncpa [#allocation4], 0
    %s13 = scalar_lea.sflag [#allocation4], 1
    %14 = vsyncpa %s13, 0
    loop: start=0, step=1, limit=4
    $region2: #{tpu_custom_call.1} parent=1 // loop_pre_header
      _
    $region3: #{tpu_custom_call.1} parent=1 // loop_header
      %s16 = sphi 0, %s20
      %p17 = scmp.ge.s32.totalorder %s16, 4
      %s24 = sphi 0, %s24
      %s26 = sphi 0, %s24
      %s27 = sphi 0, %s26
      %s41 = sphi 0, %s27
      %s45 = sphi 0, %s45
      %s47 = sphi 0, %s45
      %s48 = sphi 0, %s47
      %s62 = sphi 0, %s48
      %s68 = sphi 0, %s70
      %s71 = sphi 0, %s68
      %s72 = sphi 0, %s71
      %s88 = sphi 0, %s72
      %s94 = sphi 0, %s96
      %s97 = sphi 0, %s94
      %s98 = sphi 0, %s97
      %s114 = sphi 0, %s98
    $region4: #{tpu_custom_call.1} parent=1 // loop_header_branch
      %19 = sbr.rel (%p17) target = $region8
    $region5: #{tpu_custom_call.1} parent=1 // loop_body
      %s21 = ssub.s32 %s16, 1
      %s22 = ssub.s32 %s16, 2
      %s23 = sadd.s32 %s16, 1
      %s25 = sadd.s32 %s24, 1
      %p28 = scmp.eq.s32.totalorder %s16, 1
      %p29 = scmp.ne.s32.totalorder %s24, %s26
      %p30 = scmp.eq.s32.totalorder %s16, 0
      %p31 = por %p29, %p30
      %p32 = scmp.ne.s32.totalorder %s24, %s26
      %p33 = scmp.eq.s32.totalorder %s21, 1
      %p34 = por %p32, %p33
      %p35 = scmp.ne.s32.totalorder %s26, %s27
      %p36 = scmp.eq.s32.totalorder %s21, 0
      %p37 = por %p35, %p36
      %p38 = scmp.ne.s32.totalorder %s26, %s27
      %p39 = scmp.eq.s32.totalorder %s22, 1
      %p40 = por %p38, %p39
      %p42 = scmp.ne.s32.totalorder %s27, %s41
      %p43 = scmp.eq.s32.totalorder %s22, 0
      %p44 = por %p42, %p43
      %s46 = sadd.s32 %s45, 1
      %p49 = scmp.eq.s32.totalorder %s16, 1
      %p50 = scmp.ne.s32.totalorder %s45, %s47
      %p51 = scmp.eq.s32.totalorder %s16, 0
      %p52 = por %p50, %p51
      %p53 = scmp.ne.s32.totalorder %s45, %s47
      %p54 = scmp.eq.s32.totalorder %s21, 1
      %p55 = por %p53, %p54
      %p56 = scmp.ne.s32.totalorder %s47, %s48
      %p57 = scmp.eq.s32.totalorder %s21, 0
      %p58 = por %p56, %p57
      %p59 = scmp.ne.s32.totalorder %s47, %s48
      %p60 = scmp.eq.s32.totalorder %s22, 1
      %p61 = por %p59, %p60
      %p63 = scmp.ne.s32.totalorder %s48, %s62
      %p64 = scmp.eq.s32.totalorder %s22, 0
      %p65 = por %p63, %p64
      %s66 = ssub.s32 %s16, %s23
      %p67 = scmp.eq.s32.totalorder %s66, 0
      %s69 = sadd.s32 %s68, 1
      %s70 = scalar_select %p67, %s68, %s69
      %p73 = pneg %p67
      %p74 = scmp.eq.s32.totalorder %s16, 1
      %p75 = por %p73, %p74
      %p76 = scmp.ne.s32.totalorder %s68, %s71
      %p77 = scmp.eq.s32.totalorder %s16, 0
      %p78 = por %p76, %p77
      %p79 = scmp.ne.s32.totalorder %s68, %s71
      %p80 = scmp.eq.s32.totalorder %s21, 1
      %p81 = por %p79, %p80
      %p82 = scmp.ne.s32.totalorder %s71, %s72
      %p83 = scmp.eq.s32.totalorder %s21, 0
      %p84 = por %p82, %p83
      %p85 = scmp.ne.s32.totalorder %s71, %s72
      %p86 = scmp.eq.s32.totalorder %s22, 1
      %p87 = por %p85, %p86
      %p89 = scmp.ne.s32.totalorder %s72, %s88
      %p90 = scmp.eq.s32.totalorder %s22, 0
      %p91 = por %p89, %p90
      %s92 = ssub.s32 %s16, %s23
      %p93 = scmp.eq.s32.totalorder %s92, 0
      %s95 = sadd.s32 %s94, 1
      %s96 = scalar_select %p93, %s94, %s95
      %p99 = pneg %p93
      %p100 = scmp.eq.s32.totalorder %s16, 1
      %p101 = por %p99, %p100
      %p102 = scmp.ne.s32.totalorder %s94, %s97
      %p103 = scmp.eq.s32.totalorder %s16, 0
      %p104 = por %p102, %p103
      %p105 = scmp.ne.s32.totalorder %s94, %s97
      %p106 = scmp.eq.s32.totalorder %s21, 1
      %p107 = por %p105, %p106
      %p108 = scmp.ne.s32.totalorder %s97, %s98
      %p109 = scmp.eq.s32.totalorder %s21, 0
      %p110 = por %p108, %p109
      %p111 = scmp.ne.s32.totalorder %s97, %s98
      %p112 = scmp.eq.s32.totalorder %s22, 1
      %p113 = por %p111, %p112
      %p115 = scmp.ne.s32.totalorder %s98, %s114
      %p116 = scmp.eq.s32.totalorder %s22, 0
      %p117 = por %p115, %p116
      %p118 = scmp.le.s32.totalorder 1, %s16
      %p119 = scmp.lt.s32.totalorder %s16, 3
      %p120 = pnand %p118, %p119
      %p121 = pneg %p120
      // Predicated region
      $region9: #{tpu_custom_call.1} parent=5 // pred_check
        _
      $region10: #{tpu_custom_call.1} parent=5 // pred_check_branch
        %123 = sbr.rel (%p120) target = $region12
      $region11: #{tpu_custom_call.1} parent=5 // pred_region
        %s124 = ssub.s32 %s16, 1
        // Predicated region
        $region13: #{tpu_custom_call.1} parent=11 // pred_check
          %p125 = pneg %p37
        $region14: #{tpu_custom_call.1} parent=11 // pred_check_branch
          %127 = sbr.rel (%p125) target = $region16
        $region15: #{tpu_custom_call.1} parent=11 // pred_region
          %s129 = ssub.s32 256, 256
          %130 = vsyncadd [#allocation3], %s129
          %s131 = sshll.u32 [#allocation2], 4
          %s132 = int_to_ptr.vmem [resolvable:$true] %s131
          %137 = dma.hbm_to_vmem [thread:$0]  %s0, 256, %s132, [#allocation3], 128, 128, 8
        $region16: #{tpu_custom_call.1} parent=11 // pred_fallthru
          _
        // Predicated region
        $region17: #{tpu_custom_call.1} parent=11 // pred_check
          %p138 = pneg %p58
        $region18: #{tpu_custom_call.1} parent=11 // pred_check_branch
          %140 = sbr.rel (%p138) target = $region20
        $region19: #{tpu_custom_call.1} parent=11 // pred_region
          _
        $region20: #{tpu_custom_call.1} parent=11 // pred_fallthru
          _
      $region12: #{tpu_custom_call.1} parent=5 // pred_fallthru
        _
      %p141 = scmp.lt.s32.totalorder %s16, 2
      // Predicated region
      $region21: #{tpu_custom_call.1} parent=5 // pred_check
        %p142 = pneg %p141
      $region22: #{tpu_custom_call.1} parent=5 // pred_check_branch
        %144 = sbr.rel (%p142) target = $region24
      $region23: #{tpu_custom_call.1} parent=5 // pred_region
        // Predicated region
        $region25: #{tpu_custom_call.1} parent=23 // pred_check
          %p145 = pneg %p78
        $region26: #{tpu_custom_call.1} parent=23 // pred_check_branch
          %147 = sbr.rel (%p145) target = $region28
        $region27: #{tpu_custom_call.1} parent=23 // pred_region
          %s148 = sand.u32 %s68, 1
          %s149 = scalar_lea.sflag [#allocation6], %s148
          %s150 = sand.u32 %s68, 1
          %s151 = smul.addr %s150, 128
          %s152 = scalar_lea.vmem [#allocation5], %s151
          %s153 = smul.u32 2, %s16
          %s155 = ssub.s32 2048, 2048
          %156 = vsyncadd %s149, %s155
          %s157 = smul.addr %s153, 64
          %s158 = scalar_lea.hbm %s2, %s157
          %s159 = sshll.u32 %s152, 4
          %s160 = int_to_ptr.vmem [resolvable:$true] %s159
          %165 = dma.hbm_to_vmem [thread:$0]  %s158, 2048, %s160, %s149, 256, 128, 8
        $region28: #{tpu_custom_call.1} parent=23 // pred_fallthru
          _
      $region24: #{tpu_custom_call.1} parent=5 // pred_fallthru
        _
      %p166 = scmp.le.s32.totalorder 1, %s16
      %p167 = scmp.lt.s32.totalorder %s16, 3
      %p168 = pnand %p166, %p167
      %p169 = pneg %p168
      // Predicated region
      $region29: #{tpu_custom_call.1} parent=5 // pred_check
        _
      $region30: #{tpu_custom_call.1} parent=5 // pred_check_branch
        %171 = sbr.rel (%p168) target = $region32
      $region31: #{tpu_custom_call.1} parent=5 // pred_region
        %s172 = ssub.s32 %s16, 1
        // Predicated region
        $region33: #{tpu_custom_call.1} parent=31 // pred_check
          %p173 = pneg %p37
        $region34: #{tpu_custom_call.1} parent=31 // pred_check_branch
          %175 = sbr.rel (%p173) target = $region36
        $region35: #{tpu_custom_call.1} parent=31 // pred_region
          %176 = dma.done [#allocation3], 256
        $region36: #{tpu_custom_call.1} parent=31 // pred_fallthru
          _
        %s177 = sand.u32 %s71, 1
        %s178 = scalar_lea.sflag [#allocation6], %s177
        %s179 = sand.u32 %s71, 1
        %s180 = smul.addr %s179, 128
        %s181 = scalar_lea.vmem [#allocation5], %s180
        // Predicated region
        $region37: #{tpu_custom_call.1} parent=31 // pred_check
          %p182 = pneg %p84
        $region38: #{tpu_custom_call.1} parent=31 // pred_check_branch
          %184 = sbr.rel (%p182) target = $region40
        $region39: #{tpu_custom_call.1} parent=31 // pred_region
          %185 = dma.done %s178, 2048
        $region40: #{tpu_custom_call.1} parent=31 // pred_fallthru
          _
        %p186 = pneg %p37
        %p187 = pneg %p34
        %p188 = pneg %p58
        %p189 = pneg %p55
        %s190 = sand.u32 %s71, 1
        %s191 = scalar_lea.sflag [#allocation6], %s190
        %s192 = sand.u32 %s71, 1
        %s193 = smul.addr %s192, 128
        %s194 = scalar_lea.vmem [#allocation5], %s193
        %p195 = pneg %p84
        %p196 = pneg %p81
        %p197 = pneg %p110
        %p198 = pneg %p107
        %s199 = sand.u32 %s97, 1
        %s200 = scalar_lea.sflag [#allocation4], %s199
        %s201 = sand.u32 %s97, 1
        %s202 = smul.addr %s201, 32
        %s203 = scalar_lea.vmem [#allocation7], %s202
        %s204 = smul.u32 2, %s21
        %s205 = smul.u32 2, %s21
        %v207 = vld [vmem:[#allocation2] sm:$0xff]
        %v208 = vld [vmem:[#allocation2 + $0x8] sm:$0xff]
        %v209 = vmul.f32 %v207, %v207
        %v210 = vmul.f32 %v208, %v208
        %211 = vadd.xlane.f32.xlu0 %v209
        %v212 = vpop.xlane.xlu0 %211
        %213 = vadd.xlane.f32.xlu0 %v210
        %v214 = vpop.xlane.xlu0 %213
        %v215 = vrcp.pop 128.0
        %v216 = vmul.f32 %v212, %v215
        %v217 = vmul.f32 %v214, %v215
        %v218 = vadd.f32 %v216, 1e-06
        %v219 = vadd.f32 %v217, 1e-06
        %v220 = vrsqrt.pop %v218
        %v221 = vrsqrt.pop %v219
        %v222 = vmul.f32 %v207, %v220
        %v223 = vmul.f32 %v208, %v221
        %v224 = vld [vmem:[%s1] sm:$0x1]
        %v226 = vlaneseq
        %v227 = vshrl.u32 %v226, 7
        %v228 = vsub.s32 0, %v227
        %v229 = vrot.slane %v224, %v228
        %v231 = vmul.f32 %v222, %v229
        %v232 = vmul.f32 %v223, %v229
        %v233 = vpack.c.bf16 %v232, %v231
        %v234 = vld [vmem:[%s181] sm:$0xff]
        %v235 = vld [vmem:[%s181 + $0x8] sm:$0xff]
        %v236 = vld [vmem:[%s181 + $0x10] sm:$0xff]
        %v237 = vld [vmem:[%s181 + $0x18] sm:$0xff]
        %v238 = vld [vmem:[%s181 + $0x20] sm:$0xff]
        %v239 = vld [vmem:[%s181 + $0x28] sm:$0xff]
        %v240 = vld [vmem:[%s181 + $0x30] sm:$0xff]
        %v241 = vld [vmem:[%s181 + $0x38] sm:$0xff]
        %v242 = vld [vmem:[%s181 + $0x40] sm:$0xff]
        %v243 = vld [vmem:[%s181 + $0x48] sm:$0xff]
        %v244 = vld [vmem:[%s181 + $0x50] sm:$0xff]
        %v245 = vld [vmem:[%s181 + $0x58] sm:$0xff]
        %v246 = vld [vmem:[%s181 + $0x60] sm:$0xff]
        %v247 = vld [vmem:[%s181 + $0x68] sm:$0xff]
        %v248 = vld [vmem:[%s181 + $0x70] sm:$0xff]
        %v249 = vld [vmem:[%s181 + $0x78] sm:$0xff]
        %v266 = vunpack.c.l.b16 %v234
        %v267 = vunpack.c.h.b16 %v234
        %v268 = vunpack.c.l.b16 %v235
        %v269 = vunpack.c.h.b16 %v235
        %v270 = vunpack.c.l.b16 %v236
        %v271 = vunpack.c.h.b16 %v236
        %v272 = vunpack.c.l.b16 %v237
        %v273 = vunpack.c.h.b16 %v237
        %v274 = vunpack.c.l.b16 %v238
        %v275 = vunpack.c.h.b16 %v238
        %v276 = vunpack.c.l.b16 %v239
        %v277 = vunpack.c.h.b16 %v239
        %v278 = vunpack.c.l.b16 %v240
        %v279 = vunpack.c.h.b16 %v240
        %v280 = vunpack.c.l.b16 %v241
        %v281 = vunpack.c.h.b16 %v241
        %v282 = vunpack.c.l.b16 %v242
        %v283 = vunpack.c.h.b16 %v242
        %v284 = vunpack.c.l.b16 %v243
        %v285 = vunpack.c.h.b16 %v243
        %v286 = vunpack.c.l.b16 %v244
        %v287 = vunpack.c.h.b16 %v244
        %v288 = vunpack.c.l.b16 %v245
        %v289 = vunpack.c.h.b16 %v245
        %v290 = vunpack.c.l.b16 %v246
        %v291 = vunpack.c.h.b16 %v246
        %v292 = vunpack.c.l.b16 %v247
        %v293 = vunpack.c.h.b16 %v247
        %v294 = vunpack.c.l.b16 %v248
        %v295 = vunpack.c.h.b16 %v248
        %v296 = vunpack.c.l.b16 %v249
        %v297 = vunpack.c.h.b16 %v249
        %v298 = vpack.c.b16 %v268, %v266
        %v299 = vpack.c.b16 %v269, %v267
        %v300 = vpack.c.b16 %v272, %v270
        %v301 = vpack.c.b16 %v273, %v271
        %v302 = vpack.c.b16 %v276, %v274
        %v303 = vpack.c.b16 %v277, %v275
        %v304 = vpack.c.b16 %v280, %v278
        %v305 = vpack.c.b16 %v281, %v279
        %v306 = vpack.c.b16 %v284, %v282
        %v307 = vpack.c.b16 %v285, %v283
        %v308 = vpack.c.b16 %v288, %v286
        %v309 = vpack.c.b16 %v289, %v287
        %v310 = vpack.c.b16 %v292, %v290
        %v311 = vpack.c.b16 %v293, %v291
        %v312 = vpack.c.b16 %v296, %v294
        %v313 = vpack.c.b16 %v297, %v295
        %330 = vmatprep.subr.bf16.mxu0 %v299
        %331 = vmatpush1.bf16.msra.mxu0 %v298
        %332 = vmatprep.subr.bf16.mxu0 %v301
        %333 = vmatpush1.bf16.msra.mxu0 %v300
        %334 = vmatprep.subr.bf16.mxu0 %v303
        %335 = vmatpush1.bf16.msra.mxu0 %v302
        %336 = vmatprep.subr.bf16.mxu0 %v305
        %337 = vmatpush1.bf16.msra.mxu0 %v304
        %338 = vmatprep.subr.bf16.mxu0 %v307
        %339 = vmatpush1.bf16.msra.mxu0 %v306
        %340 = vmatprep.subr.bf16.mxu0 %v309
        %341 = vmatpush1.bf16.msra.mxu0 %v308
        %342 = vmatprep.subr.bf16.mxu0 %v311
        %343 = vmatpush1.bf16.msra.mxu0 %v310
        %344 = vmatprep.subr.bf16.mxu0 %v313
        %345 = vmatpush1.bf16.msra.mxu0 %v312
        %346 = vmatprep.subr.bf16.mxu0 0
        %347 = vmatpush1.bf16.msra.mxu0 0
        %348 = vmatprep.subr.bf16.mxu0 0
        %349 = vmatpush1.bf16.msra.mxu0 0
        %350 = vmatprep.subr.bf16.mxu0 0
        %351 = vmatpush1.bf16.msra.mxu0 0
        %352 = vmatprep.subr.bf16.mxu0 0
        %353 = vmatpush1.bf16.msra.mxu0 0
        %354 = vmatprep.subr.bf16.mxu0 0
        %355 = vmatpush1.bf16.msra.mxu0 0
        %356 = vmatprep.subr.bf16.mxu0 0
        %357 = vmatpush1.bf16.msra.mxu0 0
        %358 = vmatprep.subr.bf16.mxu0 0
        %359 = vmatpush1.bf16.msra.mxu0 0
        %360 = vmatprep.subr.bf16.mxu0 0
        %361 = vmatpush1.bf16.msra.mxu0 0
        %362 = vmatprep.mubr.bf16.mxu0 0
        %363 = vmatmul.mubr.bf16.gmra.mrb[0].mxu0 %v233
        %v364 = vpop.f32.mrb[0].mxu0
        %v365 = vadd.f32 0.0, %v364
        %v366 = vpop.f32.mrb[0].mxu0
        %v367 = vadd.f32 0.0, %v366
        %v368 = vpop.f32.mrb[0].mxu0
        %v369 = vadd.f32 0.0, %v368
        %v370 = vpop.f32.mrb[0].mxu0
        %v371 = vadd.f32 0.0, %v370
        %372 = vdwg.mxu0
        %373 = vst [vmem:[%s203] sm:$0xff] %v365
        %374 = vst [vmem:[%s203 + $0x8] sm:$0xff] %v367
        %375 = vst [vmem:[%s203 + $0x10] sm:$0xff] %v369
        %376 = vst [vmem:[%s203 + $0x18] sm:$0xff] %v371
        %s377 = sand.u32 %s97, 1
        %s378 = scalar_lea.sflag [#allocation4], %s377
        %s379 = sand.u32 %s97, 1
        %s380 = smul.addr %s379, 32
        %s381 = scalar_lea.vmem [#allocation7], %s380
        // Predicated region
        $region41: #{tpu_custom_call.1} parent=31 // pred_check
          %p382 = pneg %p107
        $region42: #{tpu_custom_call.1} parent=31 // pred_check_branch
          %384 = sbr.rel (%p382) target = $region44
        $region43: #{tpu_custom_call.1} parent=31 // pred_region
          %s385 = smul.u32 2, %s21
          %s387 = ssub.s32 512, 512
          %388 = vsyncadd %s378, %s387
          %s389 = smul.addr %s385, 128
          %s390 = scalar_lea.hbm %s3, %s389
          %s391 = sshll.u32 %s381, 4
          %s392 = int_to_ptr.vmem [resolvable:$true] %s391
          %397 = dma.vmem_to_hbm [thread:$0]  %s392, 512, %s390, %s378, 256, 512, 16
        $region44: #{tpu_custom_call.1} parent=31 // pred_fallthru
          _
      $region32: #{tpu_custom_call.1} parent=5 // pred_fallthru
        _
      %p398 = scmp.le.s32.totalorder 2, %s16
      // Predicated region
      $region45: #{tpu_custom_call.1} parent=5 // pred_check
        %p399 = pneg %p398
      $region46: #{tpu_custom_call.1} parent=5 // pred_check_branch
        %401 = sbr.rel (%p399) target = $region48
      $region47: #{tpu_custom_call.1} parent=5 // pred_region
        %s402 = ssub.s32 %s16, 2
        // Predicated region
        $region49: #{tpu_custom_call.1} parent=47 // pred_check
          %p403 = pneg %p113
        $region50: #{tpu_custom_call.1} parent=47 // pred_check_branch
          %405 = sbr.rel (%p403) target = $region52
        $region51: #{tpu_custom_call.1} parent=47 // pred_region
          %s406 = sand.u32 %s98, 1
          %s407 = scalar_lea.sflag [#allocation4], %s406
          %s408 = sand.u32 %s98, 1
          %s409 = smul.addr %s408, 32
          %s410 = scalar_lea.vmem [#allocation7], %s409
          %411 = dma.done %s407, 512
        $region52: #{tpu_custom_call.1} parent=47 // pred_fallthru
          _
      $region48: #{tpu_custom_call.1} parent=5 // pred_fallthru
        _
    $region6: #{tpu_custom_call.1} parent=1 // loop_footer
      %s20 = sadd.s32 1, %s16
    $region7: #{tpu_custom_call.1} parent=1 // loop_footer_branch
      %15 = sbr.rel target = $region3
    $region8: #{tpu_custom_call.1} parent=1 // loop_exit
      _
    %412 = vsyncpa [#allocation3], 1
    %s413 = scalar_lea.sflag [#allocation3], 1
    %414 = vsyncpa %s413, 1
    %415 = vsyncpa [#allocation6], 1
    %s416 = scalar_lea.sflag [#allocation6], 1
    %417 = vsyncpa %s416, 1
    %418 = vsyncpa [#allocation4], 1
    %s419 = scalar_lea.sflag [#allocation4], 1
    %420 = vsyncpa %s419, 1

</llo_original>
